<compile_context>
chip_gen: v7x
topology: tpu7x:2x2x1
jax: 0.10.0
libtpu: 0.0.40
codegen_flags: <defaults>
</compile_context>

<pallas_src>
import functools

import jax
import jax.numpy as jnp
from jax.experimental import pallas as pl
from jax.experimental.pallas import tpu as pltpu


def _round_up(x, m):
    return ((x + m - 1) // m) * m


def _classifier_kernel(x1_ref, x2_ref, w_ref, b_ref, o_ref, *, F, mm_dtype):
    """One batch tile.

    x1_ref : (TB, F)       input (any float dtype; upcast to f32 for VPU math)
    x2_ref : (TB, F)       input
    w_ref  : (4F, Yp)      mm_dtype, VMEM-resident across tiles (constant index_map)
    b_ref  : (1, Yp)       f32,      VMEM-resident across tiles
    o_ref  : (TB, Yp)      f32, lane-dense (Yp % 128 == 0)
    """
    # Elementwise math in f32 (safe on v5e's f32-only VPU; no-op cast if already f32).
    x1 = x1_ref[...].astype(jnp.float32)
    x2 = x2_ref[...].astype(jnp.float32)
    ad = jnp.abs(x1 - x2)
    pr = x1 * x2

    # Dropout with p=0 (module default) is an identity at inference time.
    # TODO(synk): training-mode dropout (p>0) would use pltpu.prng_seed/prng_random_bits.

    # merge_opt == 1: instead of materializing concat([x1,x2,|x1-x2|,x1*x2]) in VMEM,
    # split the K=4F contraction into four partial dots against sublane-aligned
    # weight slices; accumulate in f32 vregs.  MXU has huge slack at these sizes.
    acc = jnp.dot(x1.astype(mm_dtype), w_ref[0:F, :],
                  preferred_element_type=jnp.float32)
    acc += jnp.dot(x2.astype(mm_dtype), w_ref[F:2 * F, :],
                   preferred_element_type=jnp.float32)
    acc += jnp.dot(ad.astype(mm_dtype), w_ref[2 * F:3 * F, :],
                   preferred_element_type=jnp.float32)
    acc += jnp.dot(pr.astype(mm_dtype), w_ref[3 * F:4 * F, :],
                   preferred_element_type=jnp.float32)

    o_ref[...] = (acc + b_ref[...]).astype(o_ref.dtype)


def prepare_classifier_params(w_t, b, *, matmul_dtype=jnp.float32):
    """One-time parameter prep (hoisted out of the per-call path).

    w_t : (4F, Y)  nn.Linear weight, pre-transposed (weight.T)
    b   : (Y,) or (1, Y) bias

    Returns (w_padded, b_padded, y_size) where Y is padded up to a multiple of 128
    so output stores are lane-dense unmasked `vst`.
    """
    four_f, y = w_t.shape
    y_pad = _round_up(y, 128)
    w_p = jnp.zeros((four_f, y_pad), matmul_dtype)
    w_p = w_p.at[:, :y].set(w_t.astype(matmul_dtype))
    b_p = jnp.zeros((1, y_pad), jnp.float32)
    b_p = b_p.at[:, :y].set(jnp.reshape(b, (1, y)).astype(jnp.float32))
    return w_p, b_p, y


def classifier_forward(x1, x2, w_prepared, b_prepared, y_size, *, block_b=4096):
    """Fused Classifier (merge_opt=1) forward.

    x1, x2     : (B, F) float inputs (f32 or bf16; bf16 halves input HBM traffic)
    w_prepared : (4F, Yp) padded/cast weight from prepare_classifier_params
    b_prepared : (1, Yp)  padded f32 bias
    y_size     : true output width Y (result sliced back to (B, Y))
    """
    B, F = x1.shape
    assert x2.shape == (B, F)
    four_f, y_pad = w_prepared.shape
    assert four_f == 4 * F
    assert y_pad % 128 == 0
    mm_dtype = w_prepared.dtype

    # Large batch tile (multiple of 8) to amortize per-grid-step overhead; if the
    # whole batch fits in one tile, use B itself (block == full array dim is legal).
    tb = B if B <= block_b else max(8, (block_b // 8) * 8)
    grid_b = pl.cdiv(B, tb)   # ragged last tile handled by Pallas (no wrapper pad)

    itemsize = jnp.dtype(x1.dtype).itemsize
    cost = pl.CostEstimate(
        flops=2 * B * four_f * y_pad + 3 * B * F,
        transcendentals=0,
        bytes_accessed=(2 * B * F * itemsize
                        + w_prepared.size * jnp.dtype(mm_dtype).itemsize
                        + y_pad * 4 + B * y_pad * 4),
    )

    kernel = functools.partial(_classifier_kernel, F=F, mm_dtype=mm_dtype)

    out = pl.pallas_call(
        kernel,
        out_shape=jax.ShapeDtypeStruct((B, y_pad), jnp.float32),
        grid_spec=pltpu.PrefetchScalarGridSpec(
            num_scalar_prefetch=0,
            grid=(grid_b,),
            in_specs=[
                pl.BlockSpec((tb, F), lambda i: (i, 0)),         # x1 batch tile
                pl.BlockSpec((tb, F), lambda i: (i, 0)),         # x2 batch tile
                pl.BlockSpec((four_f, y_pad), lambda i: (0, 0)),  # weight: VMEM-resident
                pl.BlockSpec((1, y_pad), lambda i: (0, 0)),       # bias  : VMEM-resident
            ],
            out_specs=pl.BlockSpec((tb, y_pad), lambda i: (i, 0)),
        ),
        compiler_params=pltpu.CompilerParams(
            # Batch tiles are independent -> shard across both TCs on v7x.
            dimension_semantics=("parallel",),
            # Working set at tb=4096, F=32: ~7 MiB double-buffered; raise the scoped
            # cap above v5e's 16 MiB default but stay well under v7x's 64 MiB VMEM.
            vmem_limit_bytes=32 * 1024 * 1024,
        ),
        cost_estimate=cost,
    )(x1, x2, w_prepared, b_prepared)

    # Strip the lane padding (cheap; typically fused into the consumer by XLA).
    return out[:, :y_size]


def reference_forward(x1, x2, w_t, b, *, matmul_dtype=jnp.float32):
    x1 = x1.astype(jnp.float32)
    x2 = x2.astype(jnp.float32)
    feat = jnp.concatenate([x1, x2, jnp.abs(x1 - x2), x1 * x2], axis=1)
    return jnp.dot(feat.astype(matmul_dtype), w_t.astype(matmul_dtype),
                   preferred_element_type=jnp.float32) + jnp.reshape(b, (1, -1))


if __name__ == "__main__":
    # Small shapes consistent with the module: batch=8, x_size=32, y_size=16.
    B, X, Y = 8, 32, 16

    key = jax.random.PRNGKey(0)
    k1, k2, kw, kb = jax.random.split(key, 4)

    x1 = jax.random.normal(k1, (B, X), dtype=jnp.float32)
    x2 = jax.random.normal(k2, (B, X), dtype=jnp.float32)

    # nn.Linear(4*x_size, y_size)-shaped params, weight stored pre-transposed.
    bound = 1.0 / jnp.sqrt(4.0 * X)
    w_t = jax.random.uniform(kw, (4 * X, Y), minval=-bound, maxval=bound,
                             dtype=jnp.float32)
    b = jax.random.uniform(kb, (1, Y), minval=-bound, maxval=bound,
                           dtype=jnp.float32)

    # ---- Exact f32 path (default): matches the PyTorch module semantics. ----
    w_f32, b_f32, y_sz = prepare_classifier_params(w_t, b, matmul_dtype=jnp.float32)
    out_f32 = jax.block_until_ready(classifier_forward(x1, x2, w_f32, b_f32, y_sz))
    ref_f32 = reference_forward(x1, x2, w_t, b, matmul_dtype=jnp.float32)
    assert out_f32.shape == (B, Y)
    assert jnp.allclose(out_f32, ref_f32, atol=1e-5, rtol=1e-5), "f32 mismatch"

    # ---- Multi-tile + ragged last tile (grid = cdiv(B, tb), no wrapper pad). ----
    B2 = 20
    x1b = jax.random.normal(jax.random.PRNGKey(1), (B2, X), dtype=jnp.float32)
    x2b = jax.random.normal(jax.random.PRNGKey(2), (B2, X), dtype=jnp.float32)
    out_rag = jax.block_until_ready(
        classifier_forward(x1b, x2b, w_f32, b_f32, y_sz, block_b=8))
    ref_rag = reference_forward(x1b, x2b, w_t, b, matmul_dtype=jnp.float32)
    assert out_rag.shape == (B2, Y)
    assert jnp.allclose(out_rag, ref_rag, atol=1e-5, rtol=1e-5), "ragged mismatch"

    # ---- Opt-in fast path: bf16 inputs + bf16 MXU operands, f32 accumulation. ----
    w_bf, b_bf, _ = prepare_classifier_params(w_t, b, matmul_dtype=jnp.bfloat16)
    out_bf16 = jax.block_until_ready(
        classifier_forward(x1.astype(jnp.bfloat16), x2.astype(jnp.bfloat16),
                           w_bf, b_bf, y_sz))
    assert out_bf16.shape == (B, Y)
    assert jnp.allclose(out_bf16, ref_f32, atol=5e-2, rtol=5e-2), "bf16 drift vs f32"

    print("KERNEL_OK")
</pallas_src>

<mosaic_0001>
module attributes {stable_mosaic.version = 11 : i64} {
  func.func @_classifier_kernel(%arg0: i32, %arg1: memref<8x32xf32, #tpu.memory_space<vmem>>, %arg2: memref<8x32xf32, #tpu.memory_space<vmem>>, %arg3: memref<128x128xf32, #tpu.memory_space<vmem>>, %arg4: memref<1x128xf32, #tpu.memory_space<vmem>>, %arg5: memref<8x128xf32, #tpu.memory_space<vmem>>) attributes {dimension_semantics = [#tpu.dimension_semantics<parallel>], iteration_bounds = array<i64: 1>, scalar_prefetch = 0 : i64, scratch_operands = 0 : i64, tpu.core_type = #tpu.core_type<tc>, window_params = [{transform_indices = @transform_0, window_bounds = array<i64: 8, 32>}, {transform_indices = @transform_1, window_bounds = array<i64: 8, 32>}, {pipeline_mode = #tpu.pipeline_mode<synchronous>, transform_indices = @transform_2, window_bounds = array<i64: 128, 128>}, {pipeline_mode = #tpu.pipeline_mode<synchronous>, transform_indices = @transform_3, window_bounds = array<i64: 1, 128>}, {transform_indices = @transform_4, window_bounds = array<i64: 8, 128>}]} {
    %c0 = arith.constant 0 : index
    %c0_0 = arith.constant 0 : index
    %0 = vector.load %arg1[%c0, %c0_0] : memref<8x32xf32, #tpu.memory_space<vmem>>, vector<8x32xf32>
    %c0_1 = arith.constant 0 : index
    %c0_2 = arith.constant 0 : index
    %1 = vector.load %arg2[%c0_1, %c0_2] : memref<8x32xf32, #tpu.memory_space<vmem>>, vector<8x32xf32>
    %2 = arith.subf %0, %1 : vector<8x32xf32>
    %3 = math.absf %2 : vector<8x32xf32>
    %4 = arith.mulf %0, %1 : vector<8x32xf32>
    %c0_3 = arith.constant 0 : index
    %c0_4 = arith.constant 0 : index
    %5 = vector.load %arg3[%c0_3, %c0_4] : memref<128x128xf32, #tpu.memory_space<vmem>>, vector<32x128xf32>
    %cst = arith.constant dense<0.000000e+00> : vector<8x128xf32>
    %6 = tpu.matmul %0, %5, %cst {dimension_numbers = #tpu.dot_dimension_numbers<[1], [0], [0], [1], [0, 0, 1, 1], [], []>} : vector<8x32xf32>, vector<32x128xf32>, vector<8x128xf32> -> vector<8x128xf32>
    %c32 = arith.constant 32 : index
    %c0_5 = arith.constant 0 : index
    %7 = vector.load %arg3[%c32, %c0_5] : memref<128x128xf32, #tpu.memory_space<vmem>>, vector<32x128xf32>
    %cst_6 = arith.constant dense<0.000000e+00> : vector<8x128xf32>
    %8 = tpu.matmul %1, %7, %cst_6 {dimension_numbers = #tpu.dot_dimension_numbers<[1], [0], [0], [1], [0, 0, 1, 1], [], []>} : vector<8x32xf32>, vector<32x128xf32>, vector<8x128xf32> -> vector<8x128xf32>
    %9 = arith.addf %6, %8 : vector<8x128xf32>
    %c64 = arith.constant 64 : index
    %c0_7 = arith.constant 0 : index
    %10 = vector.load %arg3[%c64, %c0_7] : memref<128x128xf32, #tpu.memory_space<vmem>>, vector<32x128xf32>
    %cst_8 = arith.constant dense<0.000000e+00> : vector<8x128xf32>
    %11 = tpu.matmul %3, %10, %cst_8 {dimension_numbers = #tpu.dot_dimension_numbers<[1], [0], [0], [1], [0, 0, 1, 1], [], []>} : vector<8x32xf32>, vector<32x128xf32>, vector<8x128xf32> -> vector<8x128xf32>
    %12 = arith.addf %9, %11 : vector<8x128xf32>
    %c96 = arith.constant 96 : index
    %c0_9 = arith.constant 0 : index
    %13 = vector.load %arg3[%c96, %c0_9] : memref<128x128xf32, #tpu.memory_space<vmem>>, vector<32x128xf32>
    %cst_10 = arith.constant dense<0.000000e+00> : vector<8x128xf32>
    %14 = tpu.matmul %4, %13, %cst_10 {dimension_numbers = #tpu.dot_dimension_numbers<[1], [0], [0], [1], [0, 0, 1, 1], [], []>} : vector<8x32xf32>, vector<32x128xf32>, vector<8x128xf32> -> vector<8x128xf32>
    %15 = arith.addf %12, %14 : vector<8x128xf32>
    %c0_11 = arith.constant 0 : index
    %c0_12 = arith.constant 0 : index
    %16 = vector.load %arg4[%c0_11, %c0_12] : memref<1x128xf32, #tpu.memory_space<vmem>>, vector<1x128xf32>
    %17 = vector.broadcast %16 : vector<1x128xf32> to vector<8x128xf32>
    %18 = arith.addf %15, %17 : vector<8x128xf32>
    %c0_13 = arith.constant 0 : index
    %c0_14 = arith.constant 0 : index
    %19 = vector.load %arg5[%c0_13, %c0_14] : memref<8x128xf32, #tpu.memory_space<vmem>>, vector<8x128xf32>
    tpu.vector_store %arg5[%c0_13, %c0_14], %18 {strides = array<i32>} : memref<8x128xf32, #tpu.memory_space<vmem>>, vector<8x128xf32>,
    return
  }
  func.func @transform_0(%arg0: i32) -> (i32, i32) {
    %c0_i32 = arith.constant 0 : i32
    %c0_i32_0 = arith.constant 0 : i32
    return %arg0, %c0_i32 : i32, i32
  }
  func.func @transform_1(%arg0: i32) -> (i32, i32) {
    %c0_i32 = arith.constant 0 : i32
    %c0_i32_0 = arith.constant 0 : i32
    return %arg0, %c0_i32 : i32, i32
  }
  func.func @transform_2(%arg0: i32) -> (i32, i32) {
    %c0_i32 = arith.constant 0 : i32
    %c0_i32_0 = arith.constant 0 : i32
    %c0_i32_1 = arith.constant 0 : i32
    return %c0_i32, %c0_i32_0 : i32, i32
  }
  func.func @transform_3(%arg0: i32) -> (i32, i32) {
    %c0_i32 = arith.constant 0 : i32
    %c0_i32_0 = arith.constant 0 : i32
    %c0_i32_1 = arith.constant 0 : i32
    return %c0_i32, %c0_i32_0 : i32, i32
  }
  func.func @transform_4(%arg0: i32) -> (i32, i32) {
    %c0_i32 = arith.constant 0 : i32
    %c0_i32_0 = arith.constant 0 : i32
    return %arg0, %c0_i32 : i32, i32
  }
}

</mosaic_0001>

<llo_original>
// kernel: tpu_custom_call.1
$region0: #{tpu_custom_call.1}
  #allocation0 [shape = 'u32[]', space=smem, size = 0x4, offset = 0x4, fixed_abs, tag = 'smem constant byte address 0x4 - core index']
  #allocation1 [shape = 'u32[144,128]{1,0:T(1,128)}', space=vmem, size = 0x12000, scoped, tag = 'internal scratch']
  %s0 = inlined_call_operand.hbm [shape: f32[8,32], index: 0, kind: input, shape index: {}]
  %s1 = inlined_call_operand.hbm [shape: f32[8,32], index: 1, kind: input, shape index: {}]
  %s2 = inlined_call_operand.hbm [shape: f32[128,128], index: 2, kind: input, shape index: {}]
  %s3 = inlined_call_operand.vmem [shape: f32[1,128], index: 3, kind: input, shape index: {}]
  %s4 = inlined_call_operand.hbm [shape: f32[8,128], index: 4, kind: output, shape index: {}]
  %s5 = sld [smem:[#allocation0]]
  $region38: #{tpu_custom_call.1} parent=0
    _
  %s7 = ssub.s32 1, %s5
  %s8 = scalar_select 0, %s7, %s5
  $region1: #{tpu_custom_call.1} parent=0
    #allocation2 [shape = 'u8[4096]{0}', space=vmem, size = 0x1000, scoped, tag = 'input window, operand 0, single buffered']
    #allocation3 [shape = 's32[1]{0}', space=sflag, size = 0x4, scoped, tag = 'scoped memory for tpu_custom_call.1']
    #allocation4 [shape = 's32[1]{0}', space=sflag, size = 0x4, scoped, tag = 'scoped memory for tpu_custom_call.1']
    #allocation5 [shape = 'u8[4096]{0}', space=vmem, size = 0x1000, scoped, tag = 'input window, operand 1, single buffered']
    #allocation6 [shape = 's32[1]{0}', space=sflag, size = 0x4, scoped, tag = 'scoped memory for tpu_custom_call.1']
    #allocation7 [shape = 'u8[65536]{0}', space=vmem, size = 0x10000, scoped, tag = 'input window, operand 2, single buffered']
    #allocation8 [shape = 'u8[4096]{0}', space=vmem, size = 0x1000, scoped, tag = 'output window, operand 0, single buffered']
    %9 = vsyncpa [#allocation3], 0
    %10 = vsyncpa [#allocation6], 0
    %11 = vsyncpa [#allocation4], 0
    // Predicated region
    $region2: #{tpu_custom_call.1} parent=1 // pred_check
      _
    $region3: #{tpu_custom_call.1} parent=1 // pred_check_branch
      %13 = sbr.rel (0) target = $region5
    $region4: #{tpu_custom_call.1} parent=1 // pred_region
      %s15 = ssub.s32 128, 128
      %16 = vsyncadd [#allocation3], %s15
      %s18 = sshll.u32 [#allocation2], 4
      %s19 = int_to_ptr.vmem [resolvable:$true] %s18
      %21 = dma.hbm_to_vmem [thread:$0]  %s0, 128, %s19, [#allocation3]
    $region5: #{tpu_custom_call.1} parent=1 // pred_fallthru
      _
    // Predicated region
    $region6: #{tpu_custom_call.1} parent=1 // pred_check
      _
    $region7: #{tpu_custom_call.1} parent=1 // pred_check_branch
      %23 = sbr.rel (0) target = $region9
    $region8: #{tpu_custom_call.1} parent=1 // pred_region
      %s25 = ssub.s32 128, 128
      %26 = vsyncadd [#allocation6], %s25
      %s28 = sshll.u32 [#allocation5], 4
      %s29 = int_to_ptr.vmem [resolvable:$true] %s28
      %31 = dma.hbm_to_vmem [thread:$0]  %s1, 128, %s29, [#allocation6]
    $region9: #{tpu_custom_call.1} parent=1 // pred_fallthru
      _
    // Predicated region
    $region10: #{tpu_custom_call.1} parent=1 // pred_check
      _
    $region11: #{tpu_custom_call.1} parent=1 // pred_check_branch
      %33 = sbr.rel (0) target = $region13
    $region12: #{tpu_custom_call.1} parent=1 // pred_region
      %s35 = ssub.s32 2048, 2048
      %36 = vsyncadd [#allocation6], %s35
      %s37 = sshll.u32 [#allocation7], 4
      %s38 = int_to_ptr.vmem [resolvable:$true] %s37
      %43 = dma.hbm_to_vmem [thread:$0]  %s2, 2048, %s38, [#allocation6], 128, 128, 8
    $region13: #{tpu_custom_call.1} parent=1 // pred_fallthru
      _
    // Predicated region
    $region14: #{tpu_custom_call.1} parent=1 // pred_check
      _
    $region15: #{tpu_custom_call.1} parent=1 // pred_check_branch
      %45 = sbr.rel (0) target = $region17
    $region16: #{tpu_custom_call.1} parent=1 // pred_region
      _
    $region17: #{tpu_custom_call.1} parent=1 // pred_fallthru
      _
    // Predicated region
    $region18: #{tpu_custom_call.1} parent=1 // pred_check
      _
    $region19: #{tpu_custom_call.1} parent=1 // pred_check_branch
      %47 = sbr.rel (0) target = $region21
    $region20: #{tpu_custom_call.1} parent=1 // pred_region
      %48 = dma.done [#allocation3], 128
    $region21: #{tpu_custom_call.1} parent=1 // pred_fallthru
      _
    // Predicated region
    $region22: #{tpu_custom_call.1} parent=1 // pred_check
      _
    $region23: #{tpu_custom_call.1} parent=1 // pred_check_branch
      %50 = sbr.rel (0) target = $region25
    $region24: #{tpu_custom_call.1} parent=1 // pred_region
      %51 = dma.done [#allocation6], 128
    $region25: #{tpu_custom_call.1} parent=1 // pred_fallthru
      _
    // Predicated region
    $region26: #{tpu_custom_call.1} parent=1 // pred_check
      _
    $region27: #{tpu_custom_call.1} parent=1 // pred_check_branch
      %53 = sbr.rel (0) target = $region29
    $region28: #{tpu_custom_call.1} parent=1 // pred_region
      %54 = dma.done [#allocation6], 2048
    $region29: #{tpu_custom_call.1} parent=1 // pred_fallthru
      _
    %v55 = vld [vmem:[#allocation2] sm:$0xff]
    %v56 = vld [vmem:[#allocation5] sm:$0xff]
    %v57 = vsub.f32 %v55, %v56
    %v58 = vand.u32 2147483647, %v57
    %v59 = vmul.f32 %v55, %v56
    %v60 = vld [vmem:[#allocation7] sm:$0xff]
    %v61 = vld [vmem:[#allocation7 + $0x8] sm:$0xff]
    %v62 = vld [vmem:[#allocation7 + $0x10] sm:$0xff]
    %v63 = vld [vmem:[#allocation7 + $0x18] sm:$0xff]
    %v64 = vld [vmem:[#allocation7 + $0x20] sm:$0xff]
    %v65 = vld [vmem:[#allocation7 + $0x28] sm:$0xff]
    %v66 = vld [vmem:[#allocation7 + $0x30] sm:$0xff]
    %v67 = vld [vmem:[#allocation7 + $0x38] sm:$0xff]
    %vm68 = vcmask 261120
    %v70 = vsel %vm68, %v56, 0
    %72 = vmatprep.subr.mxu0 0.0
    %73 = vmatpush1.msra.mxu0 %v64
    %74 = vmatprep.subr.mxu0 0.0
    %75 = vmatpush1.msra.mxu0 %v65
    %76 = vmatprep.subr.mxu0 0.0
    %77 = vmatpush1.msra.mxu0 %v66
    %78 = vmatprep.subr.mxu0 0.0
    %79 = vmatpush1.msra.mxu0 %v67
    %80 = vmatprep.subr.mxu0 0.0
    %81 = vmatpush1.msra.mxu0 0.0
    %82 = vmatprep.subr.mxu0 0.0
    %83 = vmatpush1.msra.mxu0 0.0
    %84 = vmatprep.subr.mxu0 0.0
    %85 = vmatpush1.msra.mxu0 0.0
    %86 = vmatprep.subr.mxu0 0.0
    %87 = vmatpush1.msra.mxu0 0.0
    %88 = vmatprep.subr.mxu0 0.0
    %89 = vmatpush1.msra.mxu0 0.0
    %90 = vmatprep.subr.mxu0 0.0
    %91 = vmatpush1.msra.mxu0 0.0
    %92 = vmatprep.subr.mxu0 0.0
    %93 = vmatpush1.msra.mxu0 0.0
    %94 = vmatprep.subr.mxu0 0.0
    %95 = vmatpush1.msra.mxu0 0.0
    %96 = vmatprep.subr.mxu0 0.0
    %97 = vmatpush1.msra.mxu0 0.0
    %98 = vmatprep.subr.mxu0 0.0
    %99 = vmatpush1.msra.mxu0 0.0
    %100 = vmatprep.subr.mxu0 0.0
    %101 = vmatpush1.msra.mxu0 0.0
    %102 = vmatprep.subr.mxu0 0.0
    %103 = vmatpush1.msra.mxu0 0.0
    %104 = vmatprep.subr.mxu0 0.0
    %105 = vmatpush1.msra.mxu0 0.0
    %106 = vmatprep.subr.mxu0 0.0
    %107 = vmatpush1.msra.mxu0 0.0
    %108 = vmatprep.subr.mxu0 0.0
    %109 = vmatpush1.msra.mxu0 0.0
    %110 = vmatprep.subr.mxu0 0.0
    %111 = vmatpush1.msra.mxu0 0.0
    %112 = vmatprep.subr.mxu0 0.0
    %113 = vmatpush1.msra.mxu0 0.0
    %114 = vmatprep.subr.mxu0 0.0
    %115 = vmatpush1.msra.mxu0 0.0
    %116 = vmatprep.subr.mxu0 0.0
    %117 = vmatpush1.msra.mxu0 0.0
    %118 = vmatprep.subr.mxu0 0.0
    %119 = vmatpush1.msra.mxu0 0.0
    %120 = vmatprep.subr.mxu0 0.0
    %121 = vmatpush1.msra.mxu0 0.0
    %122 = vmatprep.subr.mxu0 0.0
    %123 = vmatpush1.msra.mxu0 0.0
    %124 = vmatprep.subr.mxu0 0.0
    %125 = vmatpush1.msra.mxu0 0.0
    %126 = vmatprep.subr.mxu0 0.0
    %127 = vmatpush1.msra.mxu0 0.0
    %128 = vmatprep.subr.mxu0 0.0
    %129 = vmatpush1.msra.mxu0 0.0
    %130 = vmatprep.subr.mxu0 0.0
    %131 = vmatpush1.msra.mxu0 0.0
    %132 = vmatprep.subr.mxu0 0.0
    %133 = vmatpush1.msra.mxu0 0.0
    %134 = vmatprep.subr.mxu0 0.0
    %135 = vmatpush1.msra.mxu0 0.0
    %136 = vmatprep.mubr.f32.mxu0 0.0
    %137 = vmatmul.mubr.f32.gmra.mrb[0].mxu0 %v70
    %v138 = vpop.f32.mrb[0].mxu0
    %v139 = vadd.f32 0.0, %v138
    %v140 = vpop.f32.mrb[0].mxu0
    %141 = vdwg.mxu0
    %v143 = vsel %vm68, %v55, 0
    %145 = vmatprep.subr.mxu0 0.0
    %146 = vmatpush1.msra.mxu0 %v60
    %147 = vmatprep.subr.mxu0 0.0
    %148 = vmatpush1.msra.mxu0 %v61
    %149 = vmatprep.subr.mxu0 0.0
    %150 = vmatpush1.msra.mxu0 %v62
    %151 = vmatprep.subr.mxu0 0.0
    %152 = vmatpush1.msra.mxu0 %v63
    %153 = vmatprep.subr.mxu0 0.0
    %154 = vmatpush1.msra.mxu0 0.0
    %155 = vmatprep.subr.mxu0 0.0
    %156 = vmatpush1.msra.mxu0 0.0
    %157 = vmatprep.subr.mxu0 0.0
    %158 = vmatpush1.msra.mxu0 0.0
    %159 = vmatprep.subr.mxu0 0.0
    %160 = vmatpush1.msra.mxu0 0.0
    %161 = vmatprep.subr.mxu0 0.0
    %162 = vmatpush1.msra.mxu0 0.0
    %163 = vmatprep.subr.mxu0 0.0
    %164 = vmatpush1.msra.mxu0 0.0
    %165 = vmatprep.subr.mxu0 0.0
    %166 = vmatpush1.msra.mxu0 0.0
    %167 = vmatprep.subr.mxu0 0.0
    %168 = vmatpush1.msra.mxu0 0.0
    %169 = vmatprep.subr.mxu0 0.0
    %170 = vmatpush1.msra.mxu0 0.0
    %171 = vmatprep.subr.mxu0 0.0
    %172 = vmatpush1.msra.mxu0 0.0
    %173 = vmatprep.subr.mxu0 0.0
    %174 = vmatpush1.msra.mxu0 0.0
    %175 = vmatprep.subr.mxu0 0.0
    %176 = vmatpush1.msra.mxu0 0.0
    %177 = vmatprep.subr.mxu0 0.0
    %178 = vmatpush1.msra.mxu0 0.0
    %179 = vmatprep.subr.mxu0 0.0
    %180 = vmatpush1.msra.mxu0 0.0
    %181 = vmatprep.subr.mxu0 0.0
    %182 = vmatpush1.msra.mxu0 0.0
    %183 = vmatprep.subr.mxu0 0.0
    %184 = vmatpush1.msra.mxu0 0.0
    %185 = vmatprep.subr.mxu0 0.0
    %186 = vmatpush1.msra.mxu0 0.0
    %187 = vmatprep.subr.mxu0 0.0
    %188 = vmatpush1.msra.mxu0 0.0
    %189 = vmatprep.subr.mxu0 0.0
    %190 = vmatpush1.msra.mxu0 0.0
    %191 = vmatprep.subr.mxu0 0.0
    %192 = vmatpush1.msra.mxu0 0.0
    %193 = vmatprep.subr.mxu0 0.0
    %194 = vmatpush1.msra.mxu0 0.0
    %195 = vmatprep.subr.mxu0 0.0
    %196 = vmatpush1.msra.mxu0 0.0
    %197 = vmatprep.subr.mxu0 0.0
    %198 = vmatpush1.msra.mxu0 0.0
    %199 = vmatprep.subr.mxu0 0.0
    %200 = vmatpush1.msra.mxu0 0.0
    %201 = vmatprep.subr.mxu0 0.0
    %202 = vmatpush1.msra.mxu0 0.0
    %203 = vmatprep.subr.mxu0 0.0
    %204 = vmatpush1.msra.mxu0 0.0
    %205 = vmatprep.subr.mxu0 0.0
    %206 = vmatpush1.msra.mxu0 0.0
    %207 = vmatprep.subr.mxu0 0.0
    %208 = vmatpush1.msra.mxu0 0.0
    %209 = vmatprep.mubr.f32.mxu0 0.0
    %210 = vmatmul.mubr.f32.gmra.mrb[0].mxu0 %v143
    %v211 = vpop.f32.mrb[0].mxu0
    %v212 = vadd.f32 %v139, %v211
    %v213 = vpop.f32.mrb[0].mxu0
    %214 = vdwg.mxu0
    %v215 = vld [vmem:[#allocation7 + $0x40] sm:$0xff]
    %v216 = vld [vmem:[#allocation7 + $0x48] sm:$0xff]
    %v217 = vld [vmem:[#allocation7 + $0x50] sm:$0xff]
    %v218 = vld [vmem:[#allocation7 + $0x58] sm:$0xff]
    %v220 = vsel %vm68, %v58, 0
    %222 = vmatprep.subr.mxu0 0.0
    %223 = vmatpush1.msra.mxu0 %v215
    %224 = vmatprep.subr.mxu0 0.0
    %225 = vmatpush1.msra.mxu0 %v216
    %226 = vmatprep.subr.mxu0 0.0
    %227 = vmatpush1.msra.mxu0 %v217
    %228 = vmatprep.subr.mxu0 0.0
    %229 = vmatpush1.msra.mxu0 %v218
    %230 = vmatprep.subr.mxu0 0.0
    %231 = vmatpush1.msra.mxu0 0.0
    %232 = vmatprep.subr.mxu0 0.0
    %233 = vmatpush1.msra.mxu0 0.0
    %234 = vmatprep.subr.mxu0 0.0
    %235 = vmatpush1.msra.mxu0 0.0
    %236 = vmatprep.subr.mxu0 0.0
    %237 = vmatpush1.msra.mxu0 0.0
    %238 = vmatprep.subr.mxu0 0.0
    %239 = vmatpush1.msra.mxu0 0.0
    %240 = vmatprep.subr.mxu0 0.0
    %241 = vmatpush1.msra.mxu0 0.0
    %242 = vmatprep.subr.mxu0 0.0
    %243 = vmatpush1.msra.mxu0 0.0
    %244 = vmatprep.subr.mxu0 0.0
    %245 = vmatpush1.msra.mxu0 0.0
    %246 = vmatprep.subr.mxu0 0.0
    %247 = vmatpush1.msra.mxu0 0.0
    %248 = vmatprep.subr.mxu0 0.0
    %249 = vmatpush1.msra.mxu0 0.0
    %250 = vmatprep.subr.mxu0 0.0
    %251 = vmatpush1.msra.mxu0 0.0
    %252 = vmatprep.subr.mxu0 0.0
    %253 = vmatpush1.msra.mxu0 0.0
    %254 = vmatprep.subr.mxu0 0.0
    %255 = vmatpush1.msra.mxu0 0.0
    %256 = vmatprep.subr.mxu0 0.0
    %257 = vmatpush1.msra.mxu0 0.0
    %258 = vmatprep.subr.mxu0 0.0
    %259 = vmatpush1.msra.mxu0 0.0
    %260 = vmatprep.subr.mxu0 0.0
    %261 = vmatpush1.msra.mxu0 0.0
    %262 = vmatprep.subr.mxu0 0.0
    %263 = vmatpush1.msra.mxu0 0.0
    %264 = vmatprep.subr.mxu0 0.0
    %265 = vmatpush1.msra.mxu0 0.0
    %266 = vmatprep.subr.mxu0 0.0
    %267 = vmatpush1.msra.mxu0 0.0
    %268 = vmatprep.subr.mxu0 0.0
    %269 = vmatpush1.msra.mxu0 0.0
    %270 = vmatprep.subr.mxu0 0.0
    %271 = vmatpush1.msra.mxu0 0.0
    %272 = vmatprep.subr.mxu0 0.0
    %273 = vmatpush1.msra.mxu0 0.0
    %274 = vmatprep.subr.mxu0 0.0
    %275 = vmatpush1.msra.mxu0 0.0
    %276 = vmatprep.subr.mxu0 0.0
    %277 = vmatpush1.msra.mxu0 0.0
    %278 = vmatprep.subr.mxu0 0.0
    %279 = vmatpush1.msra.mxu0 0.0
    %280 = vmatprep.subr.mxu0 0.0
    %281 = vmatpush1.msra.mxu0 0.0
    %282 = vmatprep.subr.mxu0 0.0
    %283 = vmatpush1.msra.mxu0 0.0
    %284 = vmatprep.subr.mxu0 0.0
    %285 = vmatpush1.msra.mxu0 0.0
    %286 = vmatprep.mubr.f32.mxu0 0.0
    %287 = vmatmul.mubr.f32.gmra.mrb[0].mxu0 %v220
    %v288 = vpop.f32.mrb[0].mxu0
    %v289 = vadd.f32 0.0, %v288
    %v290 = vpop.f32.mrb[0].mxu0
    %291 = vdwg.mxu0
    %v292 = vadd.f32 %v212, %v289
    %v293 = vld [vmem:[#allocation7 + $0x60] sm:$0xff]
    %v294 = vld [vmem:[#allocation7 + $0x68] sm:$0xff]
    %v295 = vld [vmem:[#allocation7 + $0x70] sm:$0xff]
    %v296 = vld [vmem:[#allocation7 + $0x78] sm:$0xff]
    %v298 = vsel %vm68, %v59, 0
    %300 = vmatprep.subr.mxu0 0.0
    %301 = vmatpush1.msra.mxu0 %v293
    %302 = vmatprep.subr.mxu0 0.0
    %303 = vmatpush1.msra.mxu0 %v294
    %304 = vmatprep.subr.mxu0 0.0
    %305 = vmatpush1.msra.mxu0 %v295
    %306 = vmatprep.subr.mxu0 0.0
    %307 = vmatpush1.msra.mxu0 %v296
    %308 = vmatprep.subr.mxu0 0.0
    %309 = vmatpush1.msra.mxu0 0.0
    %310 = vmatprep.subr.mxu0 0.0
    %311 = vmatpush1.msra.mxu0 0.0
    %312 = vmatprep.subr.mxu0 0.0
    %313 = vmatpush1.msra.mxu0 0.0
    %314 = vmatprep.subr.mxu0 0.0
    %315 = vmatpush1.msra.mxu0 0.0
    %316 = vmatprep.subr.mxu0 0.0
    %317 = vmatpush1.msra.mxu0 0.0
    %318 = vmatprep.subr.mxu0 0.0
    %319 = vmatpush1.msra.mxu0 0.0
    %320 = vmatprep.subr.mxu0 0.0
    %321 = vmatpush1.msra.mxu0 0.0
    %322 = vmatprep.subr.mxu0 0.0
    %323 = vmatpush1.msra.mxu0 0.0
    %324 = vmatprep.subr.mxu0 0.0
    %325 = vmatpush1.msra.mxu0 0.0
    %326 = vmatprep.subr.mxu0 0.0
    %327 = vmatpush1.msra.mxu0 0.0
    %328 = vmatprep.subr.mxu0 0.0
    %329 = vmatpush1.msra.mxu0 0.0
    %330 = vmatprep.subr.mxu0 0.0
    %331 = vmatpush1.msra.mxu0 0.0
    %332 = vmatprep.subr.mxu0 0.0
    %333 = vmatpush1.msra.mxu0 0.0
    %334 = vmatprep.subr.mxu0 0.0
    %335 = vmatpush1.msra.mxu0 0.0
    %336 = vmatprep.subr.mxu0 0.0
    %337 = vmatpush1.msra.mxu0 0.0
    %338 = vmatprep.subr.mxu0 0.0
    %339 = vmatpush1.msra.mxu0 0.0
    %340 = vmatprep.subr.mxu0 0.0
    %341 = vmatpush1.msra.mxu0 0.0
    %342 = vmatprep.subr.mxu0 0.0
    %343 = vmatpush1.msra.mxu0 0.0
    %344 = vmatprep.subr.mxu0 0.0
    %345 = vmatpush1.msra.mxu0 0.0
    %346 = vmatprep.subr.mxu0 0.0
    %347 = vmatpush1.msra.mxu0 0.0
    %348 = vmatprep.subr.mxu0 0.0
    %349 = vmatpush1.msra.mxu0 0.0
    %350 = vmatprep.subr.mxu0 0.0
    %351 = vmatpush1.msra.mxu0 0.0
    %352 = vmatprep.subr.mxu0 0.0
    %353 = vmatpush1.msra.mxu0 0.0
    %354 = vmatprep.subr.mxu0 0.0
    %355 = vmatpush1.msra.mxu0 0.0
    %356 = vmatprep.subr.mxu0 0.0
    %357 = vmatpush1.msra.mxu0 0.0
    %358 = vmatprep.subr.mxu0 0.0
    %359 = vmatpush1.msra.mxu0 0.0
    %360 = vmatprep.subr.mxu0 0.0
    %361 = vmatpush1.msra.mxu0 0.0
    %362 = vmatprep.subr.mxu0 0.0
    %363 = vmatpush1.msra.mxu0 0.0
    %364 = vmatprep.mubr.f32.mxu0 0.0
    %365 = vmatmul.mubr.f32.gmra.mrb[0].mxu0 %v298
    %v366 = vpop.f32.mrb[0].mxu0
    %v367 = vadd.f32 0.0, %v366
    %v368 = vpop.f32.mrb[0].mxu0
    %369 = vdwg.mxu0
    %v370 = vadd.f32 %v292, %v367
    %v371 = vld [vmem:[%s3] sm:$0x1]
    %v373 = vlaneseq
    %v374 = vshrl.u32 %v373, 7
    %v375 = vsub.s32 0, %v374
    %v376 = vrot.slane %v371, %v375
    %v378 = vadd.f32 %v370, %v376
    %379 = vst [vmem:[#allocation8] sm:$0xff] %v378
    // Predicated region
    $region30: #{tpu_custom_call.1} parent=1 // pred_check
      _
    $region31: #{tpu_custom_call.1} parent=1 // pred_check_branch
      %381 = sbr.rel (0) target = $region33
    $region32: #{tpu_custom_call.1} parent=1 // pred_region
      %s383 = ssub.s32 128, 128
      %384 = vsyncadd [#allocation4], %s383
      %s386 = sshll.u32 [#allocation8], 4
      %s387 = int_to_ptr.vmem [resolvable:$true] %s386
      %389 = dma.vmem_to_hbm [thread:$0]  %s387, 128, %s4, [#allocation4]
    $region33: #{tpu_custom_call.1} parent=1 // pred_fallthru
      _
    // Predicated region
    $region34: #{tpu_custom_call.1} parent=1 // pred_check
      _
    $region35: #{tpu_custom_call.1} parent=1 // pred_check_branch
      %391 = sbr.rel (0) target = $region37
    $region36: #{tpu_custom_call.1} parent=1 // pred_region
      %392 = dma.done [#allocation4], 128
    $region37: #{tpu_custom_call.1} parent=1 // pred_fallthru
      _
    %393 = vsyncpa [#allocation3], 1
    %394 = vsyncpa [#allocation6], 1
    %395 = vsyncpa [#allocation4], 1

</llo_original>
